<compile_context>
chip_gen: v5e
topology: v5e:2x2
jax: 0.10.0
libtpu: 0.0.40
codegen_flags: <defaults>
</compile_context>

<pallas_src>
import jax
import jax.numpy as jnp
from jax import lax
from jax.experimental import pallas as pl
from jax.experimental.pallas import tpu as pltpu

N_NODES = 16      # 2 graphs x 8 nodes (contiguous, equal-sized node blocks)
N_GRAPHS = 2
IN_DIM = 2        # module input feature width (CustomGCN(2,1), GCNConv(2,128))
HIDDEN = 128      # graph_ws = [128, 128, 128]
OUT_DIM = 3       # lin_final = Linear(prev_w, 3)
MIN_SCORE = 0.1
BN_EPS = 1e-5


# ------------------------------ fused kernel --------------------------------

def _fused_net_kernel(scal_ref, adj_ref, x_ref, mask_ref, w0_ref, w1_ref,
                      w2_ref, bshift_ref, wfin_ref, bfin_ref, out_ref):
    f32 = jnp.float32
    adj = adj_ref[...]            # (N, N)  A[dst, src], raw edge multiplicities
    x = x_ref[...]                # (N, 2)  node features
    mask_g = mask_ref[...]        # (N, G)  one-hot graph membership
    n = adj.shape[0]
    g = mask_g.shape[1]
    neg = jnp.float32(-1e30)

    # ---- attn = CustomGCN(2,1):  D1^{-1/2}(A+I)D1^{-1/2} @ (x @ w_attn) + b --
    w_a0 = scal_ref[0]
    w_a1 = scal_ref[1]
    b_attn = scal_ref[2]
    topk_w = scal_ref[3]
    deg1 = jnp.sum(adj, axis=1, keepdims=True) + 1.0            # (N,1), >= 1
    dinv1 = lax.rsqrt(deg1)
    xw = x[:, 0:1] * w_a0 + x[:, 1:2] * w_a1                    # x @ w_attn (VPU)
    z1 = dinv1 * xw
    attn = dinv1 * (jnp.dot(adj, z1, preferred_element_type=f32) + z1) + b_attn

    # ---- TopKPooling(1, min_score=0.1): per-graph softmax + keep mask --------
    score = attn * topk_w                                        # (N,1)
    sc_g = jnp.where(mask_g > 0.5, score, neg)                   # (N,G)
    m_node = jnp.sum(mask_g * jnp.max(sc_g, axis=0, keepdims=True),
                     axis=1, keepdims=True)                      # (N,1)
    e = jnp.exp(score - m_node)
    s_node = jnp.sum(mask_g * jnp.sum(mask_g * e, axis=0, keepdims=True),
                     axis=1, keepdims=True)
    soft = e / s_node
    soft_g = jnp.where(mask_g > 0.5, soft, neg)
    smax_node = jnp.sum(mask_g * jnp.max(soft_g, axis=0, keepdims=True),
                        axis=1, keepdims=True)
    thr = jnp.minimum(smax_node - 1e-7, MIN_SCORE)
    keep = (soft > thr).astype(f32)                              # (N,1)

    xs = x * (soft * keep)                                       # x[perm]*score[perm]

    # ---- adjacency restricted to kept nodes, re-normalized (gcn_norm) -------
    # A2 = D2^{-1/2}(M A M + M)D2^{-1/2};    A2 @ Y == s2*(A @ (s2*Y) + s2*Y)
    deg2 = keep * (jnp.dot(adj, keep, preferred_element_type=f32) + 1.0)
    s2 = jnp.where(deg2 > 0.0, lax.rsqrt(deg2), 0.0)             # 0 on dropped nodes

    # ---- 3x (GCNConv -> ReLU -> BatchNorm); BN scale folded into W,b ---------
    # TODO(synk): BatchNorm uses eval-mode running stats; F.dropout is identity.
    w0 = w0_ref[...]                                             # (2,128), scaled
    y = xs[:, 0:1] * w0[0:1, :] + xs[:, 1:2] * w0[1:2, :]        # xs @ w0 (VPU)
    z = s2 * y
    h = jnp.maximum(s2 * (jnp.dot(adj, z, preferred_element_type=f32) + z)
                    + bshift_ref[0:1, :], 0.0) + bshift_ref[3:4, :]

    for i, w_ref in ((1, w1_ref), (2, w2_ref)):                  # static unroll
        y = jnp.dot(h.astype(jnp.bfloat16), w_ref[...],
                    preferred_element_type=f32)                  # MXU, bf16 in
        z = s2 * y
        h = jnp.maximum(s2 * (jnp.dot(adj, z, preferred_element_type=f32) + z)
                        + bshift_ref[i:i + 1, :], 0.0) + bshift_ref[3 + i:4 + i, :]

    # ---- global_max_pool over kept nodes -------------------------------------
    # graphs are contiguous equal-sized node blocks -> single reshape + reduce
    per = n // g
    h_m = jnp.where(keep > 0.5, h, neg)                          # (N, HIDDEN)
    pooled = jnp.max(h_m.reshape(g, per, h.shape[1]), axis=1)    # (G, HIDDEN)
    nonempty = jnp.max(keep.reshape(g, per, 1), axis=1)          # (G, 1)
    pooled = jnp.where(nonempty > 0.5, pooled, 0.0)              # empty graph -> 0

    # ---- lin_final + log_softmax(dim=1) ---------------------------------------
    logits = jnp.dot(pooled, wfin_ref[...], preferred_element_type=f32) + bfin_ref[...]
    zz = logits - jnp.max(logits, axis=1, keepdims=True)
    lse = jnp.log(jnp.sum(jnp.exp(zz), axis=1, keepdims=True))
    out_ref[...] = zz - lse


def _fused_forward(scal, adj, x, mask_g, params):
    vmem = pl.BlockSpec(memory_space=pltpu.MemorySpace.VMEM)
    smem = pl.BlockSpec(memory_space=pltpu.MemorySpace.SMEM)
    return pl.pallas_call(
        _fused_net_kernel,
        out_shape=jax.ShapeDtypeStruct((N_GRAPHS, OUT_DIM), jnp.float32),
        in_specs=[smem] + [vmem] * 9,
        out_specs=vmem,
    )(scal, adj, x, mask_g, params["w0"], params["w1"], params["w2"],
      params["bshift"], params["w_fin"], params["b_fin"])


# --------------------------------- glue --------------------------------------

@jax.jit
def net_forward(x, src, dst, batch, params):
    n = x.shape[0]
    # Dense A[dst, src] with edge multiplicities (matches PyG scatter-add).
    adj = jnp.zeros((n, n), jnp.float32).at[dst, src].add(1.0)
    mask_g = (batch[:, None] ==
              jnp.arange(N_GRAPHS, dtype=batch.dtype)[None, :]).astype(jnp.float32)
    scal = jnp.stack([params["w_attn"][0, 0], params["w_attn"][1, 0],
                      params["b_attn"], params["topk_w"]])
    return _fused_forward(scal, adj, x, mask_g, params)          # (G, 3)


def init_params(key):
    ks = jax.random.split(key, 6)
    p = {}
    # CustomGCN(2, 1) weight (frozen) + bias
    p["w_attn"] = jax.random.normal(ks[0], (IN_DIM, 1), jnp.float32) / jnp.sqrt(IN_DIM)
    p["b_attn"] = jnp.zeros((), jnp.float32)
    # TopKPooling(1) weight -> scalar
    p["topk_w"] = jax.random.normal(ks[1], (), jnp.float32)

    # BatchNorm1d (eval mode, default running stats): y = scale*x + shift, with
    # scale > 0 folded into the preceding GCNConv weight/bias at init time.
    bn_scale = (1.0 + BN_EPS) ** -0.5
    biases, shifts = [], []
    prev = IN_DIM
    for i in range(3):
        w = jax.random.normal(ks[2 + i], (prev, HIDDEN), jnp.float32) / jnp.sqrt(prev)
        w = w * bn_scale                              # fold BN scale
        b = jnp.zeros((1, HIDDEN), jnp.float32) * bn_scale
        if i == 0:
            p["w0"] = w                               # (2,128) used on VPU, f32
        else:
            p[f"w{i}"] = w.astype(jnp.bfloat16)       # MXU operand, half DMA bytes
        biases.append(b)
        shifts.append(jnp.zeros((1, HIDDEN), jnp.float32))
        prev = HIDDEN
    p["bshift"] = jnp.concatenate(biases + shifts, axis=0)       # (6, HIDDEN)

    # lin_final: Linear(128, 3)
    p["w_fin"] = jax.random.normal(ks[5], (HIDDEN, OUT_DIM), jnp.float32) / jnp.sqrt(HIDDEN)
    p["b_fin"] = jnp.zeros((1, OUT_DIM), jnp.float32)
    return p


if __name__ == "__main__":
    key = jax.random.PRNGKey(0)
    k_x, k_e, k_p = jax.random.split(key, 3)

    # synthetic batched graph: 2 graphs x 8 nodes, 2-dim node features
    x = jax.random.normal(k_x, (N_NODES, IN_DIM), jnp.float32)
    per = N_NODES // N_GRAPHS
    batch = jnp.repeat(jnp.arange(N_GRAPHS, dtype=jnp.int32), per)

    src_list, dst_list = [], []
    chords = jax.device_get(jax.random.randint(k_e, (N_GRAPHS, 4, 2), 0, per))
    for gi in range(N_GRAPHS):
        base = gi * per
        for i in range(per):                          # ring (both directions)
            u, v = base + i, base + (i + 1) % per
            src_list += [u, v]; dst_list += [v, u]
        for a, o in chords[gi]:                       # random chords, no self-loops
            u = base + int(a)
            v = base + (int(a) + 1 + int(o) % (per - 1)) % per
            src_list += [u, v]; dst_list += [v, u]
    src = jnp.array(src_list, dtype=jnp.int32)
    dst = jnp.array(dst_list, dtype=jnp.int32)

    params = init_params(k_p)
    out = net_forward(x, src, dst, batch, params)
    out = jax.block_until_ready(out)
    assert out.shape == (N_GRAPHS, OUT_DIM)
    assert bool(jnp.all(jnp.isfinite(out)))
    print("KERNEL_OK")
</pallas_src>

<mosaic_0001>
module attributes {stable_mosaic.version = 11 : i64} {
  func.func @_fused_net_kernel(%arg0: memref<4xf32, #tpu.memory_space<smem>>, %arg1: memref<16x16xf32, #tpu.memory_space<vmem>>, %arg2: memref<16x2xf32, #tpu.memory_space<vmem>>, %arg3: memref<16x2xf32, #tpu.memory_space<vmem>>, %arg4: memref<2x128xf32, #tpu.memory_space<vmem>>, %arg5: memref<128x128xbf16, #tpu.memory_space<vmem>>, %arg6: memref<128x128xbf16, #tpu.memory_space<vmem>>, %arg7: memref<6x128xf32, #tpu.memory_space<vmem>>, %arg8: memref<128x3xf32, #tpu.memory_space<vmem>>, %arg9: memref<1x3xf32, #tpu.memory_space<vmem>>, %arg10: memref<2x3xf32, #tpu.memory_space<vmem>>) attributes {dimension_semantics = [], scalar_prefetch = 0 : i64, scratch_operands = 0 : i64, tpu.core_type = #tpu.core_type<tc>} {
    %c0 = arith.constant 0 : index
    %c0_0 = arith.constant 0 : index
    %0 = vector.load %arg1[%c0, %c0_0] : memref<16x16xf32, #tpu.memory_space<vmem>>, vector<16x16xf32>
    %c0_1 = arith.constant 0 : index
    %c0_2 = arith.constant 0 : index
    %1 = vector.load %arg2[%c0_1, %c0_2] : memref<16x2xf32, #tpu.memory_space<vmem>>, vector<16x2xf32>
    %c0_3 = arith.constant 0 : index
    %c0_4 = arith.constant 0 : index
    %2 = vector.load %arg3[%c0_3, %c0_4] : memref<16x2xf32, #tpu.memory_space<vmem>>, vector<16x2xf32>
    %c0_5 = arith.constant 0 : index
    %3 = memref.load %arg0[%c0_5] : memref<4xf32, #tpu.memory_space<smem>>
    %c1 = arith.constant 1 : index
    %4 = memref.load %arg0[%c1] : memref<4xf32, #tpu.memory_space<smem>>
    %c2 = arith.constant 2 : index
    %5 = memref.load %arg0[%c2] : memref<4xf32, #tpu.memory_space<smem>>
    %c3 = arith.constant 3 : index
    %6 = memref.load %arg0[%c3] : memref<4xf32, #tpu.memory_space<smem>>
    %cst = arith.constant dense<0.000000e+00> : vector<16xf32>
    %7 = vector.multi_reduction <add>, %0, %cst [1] : vector<16x16xf32> to vector<16xf32>
    %8 = vector.shape_cast %7 : vector<16xf32> to vector<16x1xf32>
    %cst_6 = arith.constant 1.000000e+00 : f32
    %9 = vector.broadcast %cst_6 : f32 to vector<16x1xf32>
    %10 = arith.addf %8, %9 : vector<16x1xf32>
    %11 = math.rsqrt %10 : vector<16x1xf32>
    %12 = vector.extract_strided_slice %1 {offsets = [0, 0], sizes = [16, 1], strides = [1, 1]} : vector<16x2xf32> to vector<16x1xf32>
    %13 = vector.broadcast %3 : f32 to vector<16x1xf32>
    %14 = arith.mulf %12, %13 : vector<16x1xf32>
    %15 = vector.extract_strided_slice %1 {offsets = [0, 1], sizes = [16, 1], strides = [1, 1]} : vector<16x2xf32> to vector<16x1xf32>
    %16 = vector.broadcast %4 : f32 to vector<16x1xf32>
    %17 = arith.mulf %15, %16 : vector<16x1xf32>
    %18 = arith.addf %14, %17 : vector<16x1xf32>
    %19 = arith.mulf %11, %18 : vector<16x1xf32>
    %cst_7 = arith.constant dense<0.000000e+00> : vector<16x1xf32>
    %20 = tpu.matmul %0, %19, %cst_7 {dimension_numbers = #tpu.dot_dimension_numbers<[1], [0], [0], [1], [0, 0, 1, 1], [], []>} : vector<16x16xf32>, vector<16x1xf32>, vector<16x1xf32> -> vector<16x1xf32>
    %21 = arith.addf %20, %19 : vector<16x1xf32>
    %22 = arith.mulf %11, %21 : vector<16x1xf32>
    %23 = vector.broadcast %5 : f32 to vector<16x1xf32>
    %24 = arith.addf %22, %23 : vector<16x1xf32>
    %25 = vector.broadcast %6 : f32 to vector<16x1xf32>
    %26 = arith.mulf %24, %25 : vector<16x1xf32>
    %cst_8 = arith.constant 5.000000e-01 : f32
    %27 = vector.broadcast %cst_8 : f32 to vector<16x2xf32>
    %28 = arith.cmpf ogt, %2, %27 : vector<16x2xf32>
    %cst_9 = arith.constant -1.000000e+30 : f32
    %29 = vector.shape_cast %26 : vector<16x1xf32> to vector<16x1xf32>
    %30 = vector.broadcast %29 : vector<16x1xf32> to vector<16x2xf32>
    %31 = vector.broadcast %cst_9 : f32 to vector<16x2xf32>
    %32 = arith.select %28, %30, %31 : vector<16x2xi1>, vector<16x2xf32>
    %cst_10 = arith.constant dense<0xFF800000> : vector<2xf32>
    %33 = vector.multi_reduction <maximumf>, %32, %cst_10 [0] : vector<16x2xf32> to vector<2xf32>
    %34 = vector.shape_cast %33 : vector<2xf32> to vector<1x2xf32>
    %35 = vector.broadcast %34 : vector<1x2xf32> to vector<16x2xf32>
    %36 = arith.mulf %2, %35 : vector<16x2xf32>
    %cst_11 = arith.constant dense<0.000000e+00> : vector<16xf32>
    %37 = vector.multi_reduction <add>, %36, %cst_11 [1] : vector<16x2xf32> to vector<16xf32>
    %38 = vector.shape_cast %37 : vector<16xf32> to vector<16x1xf32>
    %39 = arith.subf %26, %38 : vector<16x1xf32>
    %40 = math.exp %39 : vector<16x1xf32>
    %41 = vector.broadcast %40 : vector<16x1xf32> to vector<16x2xf32>
    %42 = arith.mulf %2, %41 : vector<16x2xf32>
    %cst_12 = arith.constant dense<0.000000e+00> : vector<2xf32>
    %43 = vector.multi_reduction <add>, %42, %cst_12 [0] : vector<16x2xf32> to vector<2xf32>
    %44 = vector.shape_cast %43 : vector<2xf32> to vector<1x2xf32>
    %45 = vector.broadcast %44 : vector<1x2xf32> to vector<16x2xf32>
    %46 = arith.mulf %2, %45 : vector<16x2xf32>
    %cst_13 = arith.constant dense<0.000000e+00> : vector<16xf32>
    %47 = vector.multi_reduction <add>, %46, %cst_13 [1] : vector<16x2xf32> to vector<16xf32>
    %48 = vector.shape_cast %47 : vector<16xf32> to vector<16x1xf32>
    %49 = arith.divf %40, %48 : vector<16x1xf32>
    %cst_14 = arith.constant 5.000000e-01 : f32
    %50 = vector.broadcast %cst_14 : f32 to vector<16x2xf32>
    %51 = arith.cmpf ogt, %2, %50 : vector<16x2xf32>
    %cst_15 = arith.constant -1.000000e+30 : f32
    %52 = vector.shape_cast %49 : vector<16x1xf32> to vector<16x1xf32>
    %53 = vector.broadcast %52 : vector<16x1xf32> to vector<16x2xf32>
    %54 = vector.broadcast %cst_15 : f32 to vector<16x2xf32>
    %55 = arith.select %51, %53, %54 : vector<16x2xi1>, vector<16x2xf32>
    %cst_16 = arith.constant dense<0xFF800000> : vector<2xf32>
    %56 = vector.multi_reduction <maximumf>, %55, %cst_16 [0] : vector<16x2xf32> to vector<2xf32>
    %57 = vector.shape_cast %56 : vector<2xf32> to vector<1x2xf32>
    %58 = vector.broadcast %57 : vector<1x2xf32> to vector<16x2xf32>
    %59 = arith.mulf %2, %58 : vector<16x2xf32>
    %cst_17 = arith.constant dense<0.000000e+00> : vector<16xf32>
    %60 = vector.multi_reduction <add>, %59, %cst_17 [1] : vector<16x2xf32> to vector<16xf32>
    %61 = vector.shape_cast %60 : vector<16xf32> to vector<16x1xf32>
    %cst_18 = arith.constant 1.000000e-07 : f32
    %62 = vector.broadcast %cst_18 : f32 to vector<16x1xf32>
    %63 = arith.subf %61, %62 : vector<16x1xf32>
    %cst_19 = arith.constant 1.000000e-01 : f32
    %64 = vector.broadcast %cst_19 : f32 to vector<16x1xf32>
    %65 = arith.minimumf %63, %64 : vector<16x1xf32>
    %66 = arith.cmpf ogt, %49, %65 : vector<16x1xf32>
    %67 = arith.extui %66 : vector<16x1xi1> to vector<16x1xi32>
    %68 = arith.sitofp %67 : vector<16x1xi32> to vector<16x1xf32>
    %69 = arith.mulf %49, %68 : vector<16x1xf32>
    %70 = vector.broadcast %69 : vector<16x1xf32> to vector<16x2xf32>
    %71 = arith.mulf %1, %70 : vector<16x2xf32>
    %cst_20 = arith.constant dense<0.000000e+00> : vector<16x1xf32>
    %72 = tpu.matmul %0, %68, %cst_20 {dimension_numbers = #tpu.dot_dimension_numbers<[1], [0], [0], [1], [0, 0, 1, 1], [], []>} : vector<16x16xf32>, vector<16x1xf32>, vector<16x1xf32> -> vector<16x1xf32>
    %cst_21 = arith.constant 1.000000e+00 : f32
    %73 = vector.broadcast %cst_21 : f32 to vector<16x1xf32>
    %74 = arith.addf %72, %73 : vector<16x1xf32>
    %75 = arith.mulf %68, %74 : vector<16x1xf32>
    %cst_22 = arith.constant 0.000000e+00 : f32
    %76 = vector.broadcast %cst_22 : f32 to vector<16x1xf32>
    %77 = arith.cmpf ogt, %75, %76 : vector<16x1xf32>
    %78 = math.rsqrt %75 : vector<16x1xf32>
    %cst_23 = arith.constant 0.000000e+00 : f32
    %79 = vector.broadcast %cst_23 : f32 to vector<16x1xf32>
    %80 = arith.select %77, %78, %79 : vector<16x1xi1>, vector<16x1xf32>
    %c0_24 = arith.constant 0 : index
    %c0_25 = arith.constant 0 : index
    %81 = vector.load %arg4[%c0_24, %c0_25] : memref<2x128xf32, #tpu.memory_space<vmem>>, vector<2x128xf32>
    %82 = vector.extract_strided_slice %71 {offsets = [0, 0], sizes = [16, 1], strides = [1, 1]} : vector<16x2xf32> to vector<16x1xf32>
    %83 = vector.extract_strided_slice %81 {offsets = [0, 0], sizes = [1, 128], strides = [1, 1]} : vector<2x128xf32> to vector<1x128xf32>
    %84 = vector.broadcast %82 : vector<16x1xf32> to vector<16x128xf32>
    %85 = vector.broadcast %83 : vector<1x128xf32> to vector<16x128xf32>
    %86 = arith.mulf %84, %85 : vector<16x128xf32>
    %87 = vector.extract_strided_slice %71 {offsets = [0, 1], sizes = [16, 1], strides = [1, 1]} : vector<16x2xf32> to vector<16x1xf32>
    %88 = vector.extract_strided_slice %81 {offsets = [1, 0], sizes = [1, 128], strides = [1, 1]} : vector<2x128xf32> to vector<1x128xf32>
    %89 = vector.broadcast %87 : vector<16x1xf32> to vector<16x128xf32>
    %90 = vector.broadcast %88 : vector<1x128xf32> to vector<16x128xf32>
    %91 = arith.mulf %89, %90 : vector<16x128xf32>
    %92 = arith.addf %86, %91 : vector<16x128xf32>
    %93 = vector.broadcast %80 : vector<16x1xf32> to vector<16x128xf32>
    %94 = arith.mulf %93, %92 : vector<16x128xf32>
    %cst_26 = arith.constant dense<0.000000e+00> : vector<16x128xf32>
    %95 = tpu.matmul %0, %94, %cst_26 {dimension_numbers = #tpu.dot_dimension_numbers<[1], [0], [0], [1], [0, 0, 1, 1], [], []>} : vector<16x16xf32>, vector<16x128xf32>, vector<16x128xf32> -> vector<16x128xf32>
    %96 = arith.addf %95, %94 : vector<16x128xf32>
    %97 = vector.broadcast %80 : vector<16x1xf32> to vector<16x128xf32>
    %98 = arith.mulf %97, %96 : vector<16x128xf32>
    %c0_27 = arith.constant 0 : index
    %c0_28 = arith.constant 0 : index
    %99 = vector.load %arg7[%c0_27, %c0_28] : memref<6x128xf32, #tpu.memory_space<vmem>>, vector<1x128xf32>
    %100 = vector.broadcast %99 : vector<1x128xf32> to vector<16x128xf32>
    %101 = arith.addf %98, %100 : vector<16x128xf32>
    %cst_29 = arith.constant 0.000000e+00 : f32
    %102 = vector.broadcast %cst_29 : f32 to vector<16x128xf32>
    %103 = arith.maximumf %101, %102 : vector<16x128xf32>
    %c3_30 = arith.constant 3 : index
    %c0_31 = arith.constant 0 : index
    %104 = vector.load %arg7[%c3_30, %c0_31] : memref<6x128xf32, #tpu.memory_space<vmem>>, vector<1x128xf32>
    %105 = vector.broadcast %104 : vector<1x128xf32> to vector<16x128xf32>
    %106 = arith.addf %103, %105 : vector<16x128xf32>
    %107 = arith.truncf %106 : vector<16x128xf32> to vector<16x128xbf16>
    %c0_32 = arith.constant 0 : index
    %c0_33 = arith.constant 0 : index
    %108 = vector.load %arg5[%c0_32, %c0_33] : memref<128x128xbf16, #tpu.memory_space<vmem>>, vector<128x128xbf16>
    %cst_34 = arith.constant dense<0.000000e+00> : vector<16x128xf32>
    %109 = tpu.matmul %107, %108, %cst_34 {dimension_numbers = #tpu.dot_dimension_numbers<[1], [0], [0], [1], [0, 0, 1, 1], [], []>} : vector<16x128xbf16>, vector<128x128xbf16>, vector<16x128xf32> -> vector<16x128xf32>
    %110 = vector.broadcast %80 : vector<16x1xf32> to vector<16x128xf32>
    %111 = arith.mulf %110, %109 : vector<16x128xf32>
    %cst_35 = arith.constant dense<0.000000e+00> : vector<16x128xf32>
    %112 = tpu.matmul %0, %111, %cst_35 {dimension_numbers = #tpu.dot_dimension_numbers<[1], [0], [0], [1], [0, 0, 1, 1], [], []>} : vector<16x16xf32>, vector<16x128xf32>, vector<16x128xf32> -> vector<16x128xf32>
    %113 = arith.addf %112, %111 : vector<16x128xf32>
    %114 = vector.broadcast %80 : vector<16x1xf32> to vector<16x128xf32>
    %115 = arith.mulf %114, %113 : vector<16x128xf32>
    %c1_36 = arith.constant 1 : index
    %c0_37 = arith.constant 0 : index
    %116 = vector.load %arg7[%c1_36, %c0_37] : memref<6x128xf32, #tpu.memory_space<vmem>>, vector<1x128xf32>
    %117 = vector.broadcast %116 : vector<1x128xf32> to vector<16x128xf32>
    %118 = arith.addf %115, %117 : vector<16x128xf32>
    %cst_38 = arith.constant 0.000000e+00 : f32
    %119 = vector.broadcast %cst_38 : f32 to vector<16x128xf32>
    %120 = arith.maximumf %118, %119 : vector<16x128xf32>
    %c4 = arith.constant 4 : index
    %c0_39 = arith.constant 0 : index
    %121 = vector.load %arg7[%c4, %c0_39] : memref<6x128xf32, #tpu.memory_space<vmem>>, vector<1x128xf32>
    %122 = vector.broadcast %121 : vector<1x128xf32> to vector<16x128xf32>
    %123 = arith.addf %120, %122 : vector<16x128xf32>
    %124 = arith.truncf %123 : vector<16x128xf32> to vector<16x128xbf16>
    %c0_40 = arith.constant 0 : index
    %c0_41 = arith.constant 0 : index
    %125 = vector.load %arg6[%c0_40, %c0_41] : memref<128x128xbf16, #tpu.memory_space<vmem>>, vector<128x128xbf16>
    %cst_42 = arith.constant dense<0.000000e+00> : vector<16x128xf32>
    %126 = tpu.matmul %124, %125, %cst_42 {dimension_numbers = #tpu.dot_dimension_numbers<[1], [0], [0], [1], [0, 0, 1, 1], [], []>} : vector<16x128xbf16>, vector<128x128xbf16>, vector<16x128xf32> -> vector<16x128xf32>
    %127 = vector.broadcast %80 : vector<16x1xf32> to vector<16x128xf32>
    %128 = arith.mulf %127, %126 : vector<16x128xf32>
    %cst_43 = arith.constant dense<0.000000e+00> : vector<16x128xf32>
    %129 = tpu.matmul %0, %128, %cst_43 {dimension_numbers = #tpu.dot_dimension_numbers<[1], [0], [0], [1], [0, 0, 1, 1], [], []>} : vector<16x16xf32>, vector<16x128xf32>, vector<16x128xf32> -> vector<16x128xf32>
    %130 = arith.addf %129, %128 : vector<16x128xf32>
    %131 = vector.broadcast %80 : vector<16x1xf32> to vector<16x128xf32>
    %132 = arith.mulf %131, %130 : vector<16x128xf32>
    %c2_44 = arith.constant 2 : index
    %c0_45 = arith.constant 0 : index
    %133 = vector.load %arg7[%c2_44, %c0_45] : memref<6x128xf32, #tpu.memory_space<vmem>>, vector<1x128xf32>
    %134 = vector.broadcast %133 : vector<1x128xf32> to vector<16x128xf32>
    %135 = arith.addf %132, %134 : vector<16x128xf32>
    %cst_46 = arith.constant 0.000000e+00 : f32
    %136 = vector.broadcast %cst_46 : f32 to vector<16x128xf32>
    %137 = arith.maximumf %135, %136 : vector<16x128xf32>
    %c5 = arith.constant 5 : index
    %c0_47 = arith.constant 0 : index
    %138 = vector.load %arg7[%c5, %c0_47] : memref<6x128xf32, #tpu.memory_space<vmem>>, vector<1x128xf32>
    %139 = vector.broadcast %138 : vector<1x128xf32> to vector<16x128xf32>
    %140 = arith.addf %137, %139 : vector<16x128xf32>
    %cst_48 = arith.constant 5.000000e-01 : f32
    %141 = vector.broadcast %cst_48 : f32 to vector<16x1xf32>
    %142 = arith.cmpf ogt, %68, %141 : vector<16x1xf32>
    %cst_49 = arith.constant -1.000000e+30 : f32
    %143 = vector.shape_cast %142 : vector<16x1xi1> to vector<16x1xi1>
    %144 = vector.broadcast %143 : vector<16x1xi1> to vector<16x128xi1>
    %145 = vector.broadcast %cst_49 : f32 to vector<16x128xf32>
    %146 = arith.select %144, %140, %145 : vector<16x128xi1>, vector<16x128xf32>
    %147 = vector.shape_cast %146 : vector<16x128xf32> to vector<2x8x128xf32>
    %cst_50 = arith.constant dense<0xFF800000> : vector<2x128xf32>
    %148 = vector.multi_reduction <maximumf>, %147, %cst_50 [1] : vector<2x8x128xf32> to vector<2x128xf32>
    %149 = vector.shape_cast %68 : vector<16x1xf32> to vector<2x8x1xf32>
    %cst_51 = arith.constant dense<0xFF800000> : vector<2x1xf32>
    %150 = vector.multi_reduction <maximumf>, %149, %cst_51 [1] : vector<2x8x1xf32> to vector<2x1xf32>
    %cst_52 = arith.constant 5.000000e-01 : f32
    %151 = vector.broadcast %cst_52 : f32 to vector<2x1xf32>
    %152 = arith.cmpf ogt, %150, %151 : vector<2x1xf32>
    %cst_53 = arith.constant 0.000000e+00 : f32
    %153 = vector.shape_cast %152 : vector<2x1xi1> to vector<2x1xi1>
    %154 = vector.broadcast %153 : vector<2x1xi1> to vector<2x128xi1>
    %155 = vector.broadcast %cst_53 : f32 to vector<2x128xf32>
    %156 = arith.select %154, %148, %155 : vector<2x128xi1>, vector<2x128xf32>
    %c0_54 = arith.constant 0 : index
    %c0_55 = arith.constant 0 : index
    %157 = vector.load %arg8[%c0_54, %c0_55] : memref<128x3xf32, #tpu.memory_space<vmem>>, vector<128x3xf32>
    %cst_56 = arith.constant dense<0.000000e+00> : vector<2x3xf32>
    %158 = tpu.matmul %156, %157, %cst_56 {dimension_numbers = #tpu.dot_dimension_numbers<[1], [0], [0], [1], [0, 0, 1, 1], [], []>} : vector<2x128xf32>, vector<128x3xf32>, vector<2x3xf32> -> vector<2x3xf32>
    %c0_57 = arith.constant 0 : index
    %c0_58 = arith.constant 0 : index
    %159 = vector.load %arg9[%c0_57, %c0_58] : memref<1x3xf32, #tpu.memory_space<vmem>>, vector<1x3xf32>
    %160 = vector.broadcast %159 : vector<1x3xf32> to vector<2x3xf32>
    %161 = arith.addf %158, %160 : vector<2x3xf32>
    %cst_59 = arith.constant dense<0xFF800000> : vector<2xf32>
    %162 = vector.multi_reduction <maximumf>, %161, %cst_59 [1] : vector<2x3xf32> to vector<2xf32>
    %163 = vector.shape_cast %162 : vector<2xf32> to vector<2x1xf32>
    %164 = vector.broadcast %163 : vector<2x1xf32> to vector<2x3xf32>
    %165 = arith.subf %161, %164 : vector<2x3xf32>
    %166 = math.exp %165 : vector<2x3xf32>
    %cst_60 = arith.constant dense<0.000000e+00> : vector<2xf32>
    %167 = vector.multi_reduction <add>, %166, %cst_60 [1] : vector<2x3xf32> to vector<2xf32>
    %168 = vector.shape_cast %167 : vector<2xf32> to vector<2x1xf32>
    %169 = math.log %168 : vector<2x1xf32>
    %170 = vector.broadcast %169 : vector<2x1xf32> to vector<2x3xf32>
    %171 = arith.subf %165, %170 : vector<2x3xf32>
    %c0_61 = arith.constant 0 : index
    %c0_62 = arith.constant 0 : index
    %172 = vector.load %arg10[%c0_61, %c0_62] : memref<2x3xf32, #tpu.memory_space<vmem>>, vector<2x3xf32>
    tpu.vector_store %arg10[%c0_61, %c0_62], %171 {strides = array<i32>} : memref<2x3xf32, #tpu.memory_space<vmem>>, vector<2x3xf32>,
    return
  }
}

</mosaic_0001>

<llo_original>
// kernel: net_forward.1
$region0: #{net_forward.1}
  #allocation0 [shape = 'u32[]', space=smem, size = 0x4, offset = 0x4, fixed_abs, tag = 'smem constant byte address 0x4 - core index']
  #allocation1 [shape = 'u32[72,128]{1,0:T(1,128)}', space=vmem, size = 0x9000, scoped, tag = 'internal scratch']
  %s0 = inlined_call_operand.vmem [shape: f32[4], index: 0, kind: input, shape index: {}]
  %s1 = inlined_call_operand.vmem [shape: f32[16,16], index: 1, kind: input, shape index: {}]
  %s2 = inlined_call_operand.vmem [shape: f32[16,2], index: 2, kind: input, shape index: {}]
  %s3 = inlined_call_operand.vmem [shape: f32[16,2], index: 3, kind: input, shape index: {}]
  %s4 = inlined_call_operand.vmem [shape: f32[2,128], index: 4, kind: input, shape index: {}]
  %s5 = inlined_call_operand.vmem [shape: bf16[128,128], index: 5, kind: input, shape index: {}]
  %s6 = inlined_call_operand.vmem [shape: bf16[128,128], index: 6, kind: input, shape index: {}]
  %s7 = inlined_call_operand.vmem [shape: f32[6,128], index: 7, kind: input, shape index: {}]
  %s8 = inlined_call_operand.vmem [shape: f32[128,3], index: 8, kind: input, shape index: {}]
  %s9 = inlined_call_operand.vmem [shape: f32[1,3], index: 9, kind: input, shape index: {}]
  %s10 = inlined_call_operand.hbm [shape: f32[2,3], index: 10, kind: output, shape index: {}]
  %s11 = sld [smem:[#allocation0]]
  $region54: #{net_forward.1} parent=0
    _
  %s13 = ssub.s32 1, %s11
  %s14 = scalar_select 0, %s13, %s11
  $region1: #{net_forward.1} parent=0
    #allocation2 [shape = 'u8[512]{0}', space=smem, size = 0x200, scoped, tag = 'input window, operand 0, single buffered']
    #allocation3 [shape = 's32[1]{0}', space=sflag, size = 0x4, scoped, tag = 'scoped memory for net_forward.1']
    #allocation4 [shape = 's32[1]{0}', space=sflag, size = 0x4, scoped, tag = 'scoped memory for net_forward.1']
    #allocation5 [shape = 'u8[1024]{0}', space=vmem, size = 0x400, scoped, tag = 'output window, operand 0, single buffered']
    %15 = vsyncpa [#allocation4], 0
    %16 = vsyncpa [#allocation3], 0
    // Predicated region
    $region2: #{net_forward.1} parent=1 // pred_check
      _
    $region3: #{net_forward.1} parent=1 // pred_check_branch
      %18 = sbr.rel (0) target = $region5
    $region4: #{net_forward.1} parent=1 // pred_region
      %20 = vsyncadd [#allocation4], 0
      %s22 = sshll.u32 %s0, 4
      %s23 = int_to_ptr.vmem [resolvable:$true] %s22
      %25 = dma.vmem_to_smem %s23, 16, [#allocation2], [#allocation4]
    $region5: #{net_forward.1} parent=1 // pred_fallthru
      _
    // Predicated region
    $region6: #{net_forward.1} parent=1 // pred_check
      _
    $region7: #{net_forward.1} parent=1 // pred_check_branch
      %27 = sbr.rel (0) target = $region9
    $region8: #{net_forward.1} parent=1 // pred_region
      _
    $region9: #{net_forward.1} parent=1 // pred_fallthru
      _
    // Predicated region
    $region10: #{net_forward.1} parent=1 // pred_check
      _
    $region11: #{net_forward.1} parent=1 // pred_check_branch
      %29 = sbr.rel (0) target = $region13
    $region12: #{net_forward.1} parent=1 // pred_region
      _
    $region13: #{net_forward.1} parent=1 // pred_fallthru
      _
    // Predicated region
    $region14: #{net_forward.1} parent=1 // pred_check
      _
    $region15: #{net_forward.1} parent=1 // pred_check_branch
      %31 = sbr.rel (0) target = $region17
    $region16: #{net_forward.1} parent=1 // pred_region
      _
    $region17: #{net_forward.1} parent=1 // pred_fallthru
      _
    // Predicated region
    $region18: #{net_forward.1} parent=1 // pred_check
      _
    $region19: #{net_forward.1} parent=1 // pred_check_branch
      %33 = sbr.rel (0) target = $region21
    $region20: #{net_forward.1} parent=1 // pred_region
      _
    $region21: #{net_forward.1} parent=1 // pred_fallthru
      _
    // Predicated region
    $region22: #{net_forward.1} parent=1 // pred_check
      _
    $region23: #{net_forward.1} parent=1 // pred_check_branch
      %35 = sbr.rel (0) target = $region25
    $region24: #{net_forward.1} parent=1 // pred_region
      _
    $region25: #{net_forward.1} parent=1 // pred_fallthru
      _
    // Predicated region
    $region26: #{net_forward.1} parent=1 // pred_check
      _
    $region27: #{net_forward.1} parent=1 // pred_check_branch
      %37 = sbr.rel (0) target = $region29
    $region28: #{net_forward.1} parent=1 // pred_region
      _
    $region29: #{net_forward.1} parent=1 // pred_fallthru
      _
    // Predicated region
    $region30: #{net_forward.1} parent=1 // pred_check
      _
    $region31: #{net_forward.1} parent=1 // pred_check_branch
      %39 = sbr.rel (0) target = $region33
    $region32: #{net_forward.1} parent=1 // pred_region
      _
    $region33: #{net_forward.1} parent=1 // pred_fallthru
      _
    // Predicated region
    $region34: #{net_forward.1} parent=1 // pred_check
      _
    $region35: #{net_forward.1} parent=1 // pred_check_branch
      %41 = sbr.rel (0) target = $region37
    $region36: #{net_forward.1} parent=1 // pred_region
      _
    $region37: #{net_forward.1} parent=1 // pred_fallthru
      _
    // Predicated region
    $region38: #{net_forward.1} parent=1 // pred_check
      _
    $region39: #{net_forward.1} parent=1 // pred_check_branch
      %43 = sbr.rel (0) target = $region41
    $region40: #{net_forward.1} parent=1 // pred_region
      _
    $region41: #{net_forward.1} parent=1 // pred_fallthru
      _
    // Predicated region
    $region42: #{net_forward.1} parent=1 // pred_check
      _
    $region43: #{net_forward.1} parent=1 // pred_check_branch
      %45 = sbr.rel (0) target = $region45
    $region44: #{net_forward.1} parent=1 // pred_region
      %47 = dma.done [#allocation4], 16
    $region45: #{net_forward.1} parent=1 // pred_fallthru
      _
    %48 = sfence
    %v49 = vld [vmem:[%s1] sm:$0xff]
    %v50 = vld [vmem:[%s1 + $0x8] sm:$0xff]
    %v51 = vld [vmem:[%s2] sm:$0xff]
    %v52 = vld [vmem:[%s2 + $0x8] sm:$0xff]
    %v53 = vld [vmem:[%s3] sm:$0xff]
    %v54 = vld [vmem:[%s3 + $0x8] sm:$0xff]
    %s55 = sld [smem:[#allocation2]]
    %s56 = sld [smem:[#allocation2 + $0x1]]
    %s57 = sld [smem:[#allocation2 + $0x2]]
    %s58 = sld [smem:[#allocation2 + $0x3]]
    %vm59 = vcmask 130048
    %v60 = vsel %vm59, %v49, 0.0
    %61 = vadd.xlane.f32.xlu0 %v60
    %v62 = vpop.xlane.xlu0 %61
    %v63 = vsel %vm59, %v50, 0.0
    %64 = vadd.xlane.f32.xlu0 %v63
    %v65 = vpop.xlane.xlu0 %64
    %v66 = vadd.f32 %v62, 1.0
    %v67 = vadd.f32 %v65, 1.0
    %v68 = vrsqrt.pop %v66
    %v69 = vmul.f32 %v68, %v66
    %v70 = vmul.f32 %v69, %v68
    %v71 = vmul.f32 0.5, %v70
    %v72 = vsub.f32 1.5, %v71
    %v73 = vmul.f32 %v68, %v72
    %vm74 = vweird.f32 %v66
    %vm75 = vweird.f32 %v68
    %vm76 = vmor %vm74, %vm75
    %v77 = vsel %vm76, %v68, %v73
    %v78 = vrsqrt.pop %v67
    %v79 = vmul.f32 %v78, %v67
    %v80 = vmul.f32 %v79, %v78
    %v81 = vmul.f32 0.5, %v80
    %v82 = vsub.f32 1.5, %v81
    %v83 = vmul.f32 %v78, %v82
    %vm84 = vweird.f32 %v67
    %vm85 = vweird.f32 %v78
    %vm86 = vmor %vm84, %vm85
    %v87 = vsel %vm86, %v78, %v83
    %v88 = vstv %s55
    %v89 = vmul.f32 %v51, %v88
    %v90 = vmul.f32 %v52, %v88
    %v91 = vstv %s56
    %v92 = vmul.f32 %v51, %v91
    %v93 = vmul.f32 %v52, %v91
    %96 = vrot.lane.b32.xlu0 %v92, 127
    %v97 = vpop.permute.xlu0 %96
    %98 = vrot.lane.b32.xlu0 %v93, 127
    %v99 = vpop.permute.xlu0 %98
    %v102 = vadd.f32 %v89, %v97
    %v103 = vadd.f32 %v90, %v99
    %v104 = vmul.f32 %v77, %v102
    %v105 = vmul.f32 %v87, %v103
    %v107 = vsel %vm59, %v49, 0
    %v110 = vsel %vm59, %v50, 0
    %112 = vmatpush.msra.mxu0 0.0
    %113 = vmatpush.msra.mxu0 0.0
    %114 = vmatpush.msra.mxu0 0.0
    %115 = vmatpush.msra.mxu0 0.0
    %116 = vmatpush.msra.mxu0 0.0
    %117 = vmatpush.msra.mxu0 0.0
    %118 = vmatpush.msra.mxu0 0.0
    %119 = vmatpush.msra.mxu0 0.0
    %120 = vmatpush.msra.mxu0 0.0
    %121 = vmatpush.msra.mxu0 0.0
    %122 = vmatpush.msra.mxu0 0.0
    %123 = vmatpush.msra.mxu0 0.0
    %124 = vmatpush.msra.mxu0 0.0
    %125 = vmatpush.msra.mxu0 0.0
    %126 = vmatpush.msra.mxu0 %v105
    %127 = vmatpush.msra.mxu0 %v104
    %128 = vmatmul.f32.gmra.mxu0 %v107
    %v129 = vpop.f32.mrf.mxu0
    %v130 = vadd.f32 %v104, %v129
    %131 = vmatmul.f32.gmra.mxu0 %v110
    %v132 = vpop.f32.mrf.mxu0
    %v133 = vadd.f32 %v105, %v132
    %134 = vdwg.mxu0
    %v135 = vmul.f32 %v77, %v130
    %v136 = vmul.f32 %v87, %v133
    %v137 = vstv %s57
    %v138 = vadd.f32 %v135, %v137
    %v139 = vadd.f32 %v136, %v137
    %v140 = vstv %s58
    %v141 = vmul.f32 %v138, %v140
    %v142 = vmul.f32 %v139, %v140
    %vm143 = vcmp.gt.f32.partialorder %v53, 0.5
    %vm144 = vcmp.gt.f32.partialorder %v54, 0.5
    %146 = vset.pattern.permute.xlu0 0
    %147 = vperm.xlu0 %146, %v141
    %v148 = vpop.permute.xlu0 %147
    %151 = vset.pattern.permute.xlu0 0
    %152 = vperm.xlu0 %151, %v142
    %v153 = vpop.permute.xlu0 %152
    %v155 = vsel %vm143, %v148, -1e+30
    %v156 = vsel %vm144, %v153, -1e+30
    %vm157 = vcmask 15360
    %v158 = vsel %vm157, %v155, -inf
    %v159 = vsel %vm157, %v156, -inf
    %v160 = vmax.f32 %v158, %v159
    %v161 = vrot.slane %v160, 4
    %v162 = vmax.f32 %v160, %v161
    %v163 = vrot.slane %v162, 2
    %v164 = vmax.f32 %v162, %v163
    %v165 = vrot.slane %v164, 1
    %v166 = vmax.f32 %v164, %v165
    %v167 = vmul.f32 %v53, %v166
    %v168 = vmul.f32 %v54, %v166
    %v169 = vsel %vm157, %v167, 0.0
    %170 = vadd.xlane.f32.xlu0 %v169
    %v171 = vpop.xlane.xlu0 %170
    %v172 = vsel %vm157, %v168, 0.0
    %173 = vadd.xlane.f32.xlu0 %v172
    %v174 = vpop.xlane.xlu0 %173
    %v175 = vsub.f32 %v141, %v171
    %v176 = vsub.f32 %v142, %v174
    %v177 = vmul.f32 %v175, 1.442695
    %v178 = vpow.pop %v177
    %v179 = vmul.f32 %v176, 1.442695
    %v180 = vpow.pop %v179
    %182 = vset.pattern.permute.xlu0 0
    %183 = vperm.xlu0 %182, %v178
    %v184 = vpop.permute.xlu0 %183
    %187 = vset.pattern.permute.xlu0 0
    %188 = vperm.xlu0 %187, %v180
    %v189 = vpop.permute.xlu0 %188
    %v191 = vmul.f32 %v53, %v184
    %v192 = vmul.f32 %v54, %v189
    %v193 = vsel %vm157, %v191, 0.0
    %v194 = vsel %vm157, %v192, 0.0
    %v195 = vadd.f32 %v193, %v194
    %v196 = vrot.slane %v195, 4
    %v197 = vadd.f32 %v195, %v196
    %v198 = vrot.slane %v197, 2
    %v199 = vadd.f32 %v197, %v198
    %v200 = vrot.slane %v199, 1
    %v201 = vadd.f32 %v199, %v200
    %v202 = vmul.f32 %v53, %v201
    %v203 = vmul.f32 %v54, %v201
    %v204 = vsel %vm157, %v202, 0.0
    %205 = vadd.xlane.f32.xlu0 %v204
    %v206 = vpop.xlane.xlu0 %205
    %v207 = vsel %vm157, %v203, 0.0
    %208 = vadd.xlane.f32.xlu0 %v207
    %v209 = vpop.xlane.xlu0 %208
    %v210 = vrcp.pop %v206
    %v211 = vmul.f32 %v206, %v210
    %v212 = vsub.f32 1.0, %v211
    %v213 = vmul.f32 %v210, %v212
    %v214 = vadd.f32 %v210, %v213
    %vm215 = vweird.f32 %v206
    %vm216 = vweird.f32 %v210
    %vm217 = vmor %vm215, %vm216
    %v218 = vsel %vm217, %v210, %v214
    %v219 = vand.u32 2147483647, %v206
    %vm220 = vcmp.eq.f32.partialorder %v219, 8.507059e+37
    %v221 = vand.u32 %v206, 2147483648
    %v222 = vor.u32 1.1754944e-38, %v221
    %v223 = vsel %vm220, %v222, %v218
    %v224 = vmul.f32 %v178, %v223
    %v225 = vrcp.pop %v209
    %v226 = vmul.f32 %v209, %v225
    %v227 = vsub.f32 1.0, %v226
    %v228 = vmul.f32 %v225, %v227
    %v229 = vadd.f32 %v225, %v228
    %vm230 = vweird.f32 %v209
    %vm231 = vweird.f32 %v225
    %vm232 = vmor %vm230, %vm231
    %v233 = vsel %vm232, %v225, %v229
    %v234 = vand.u32 2147483647, %v209
    %vm235 = vcmp.eq.f32.partialorder %v234, 8.507059e+37
    %v236 = vand.u32 %v209, 2147483648
    %v237 = vor.u32 1.1754944e-38, %v236
    %v238 = vsel %vm235, %v237, %v233
    %v239 = vmul.f32 %v180, %v238
    %241 = vset.pattern.permute.xlu0 0
    %242 = vperm.xlu0 %241, %v224
    %v243 = vpop.permute.xlu0 %242
    %246 = vset.pattern.permute.xlu0 0
    %247 = vperm.xlu0 %246, %v239
    %v248 = vpop.permute.xlu0 %247
    %v250 = vsel %vm143, %v243, -1e+30
    %v251 = vsel %vm144, %v248, -1e+30
    %v252 = vsel %vm157, %v250, -inf
    %v253 = vsel %vm157, %v251, -inf
    %v254 = vmax.f32 %v252, %v253
    %v255 = vrot.slane %v254, 4
    %v256 = vmax.f32 %v254, %v255
    %v257 = vrot.slane %v256, 2
    %v258 = vmax.f32 %v256, %v257
    %v259 = vrot.slane %v258, 1
    %v260 = vmax.f32 %v258, %v259
    %v261 = vmul.f32 %v53, %v260
    %v262 = vmul.f32 %v54, %v260
    %v263 = vsel %vm157, %v261, 0.0
    %264 = vadd.xlane.f32.xlu0 %v263
    %v265 = vpop.xlane.xlu0 %264
    %v266 = vsel %vm157, %v262, 0.0
    %267 = vadd.xlane.f32.xlu0 %v266
    %v268 = vpop.xlane.xlu0 %267
    %v269 = vsub.f32 %v265, 1e-07
    %v270 = vsub.f32 %v268, 1e-07
    %v271 = vmin.f32 %v269, 0.1
    %v272 = vmin.f32 %v270, 0.1
    %vm273 = vcmp.gt.f32.partialorder %v224, %v271
    %vm274 = vcmp.gt.f32.partialorder %v239, %v272
    %v275 = vsel %vm273, 1, 0
    %v276 = vsel %vm274, 1, 0
    %v277 = vcvt.s32.f32 %v275
    %v278 = vcvt.s32.f32 %v276
    %v279 = vmul.f32 %v224, %v277
    %v280 = vmul.f32 %v239, %v278
    %282 = vset.pattern.permute.xlu0 0
    %283 = vperm.xlu0 %282, %v279
    %v284 = vpop.permute.xlu0 %283
    %287 = vset.pattern.permute.xlu0 0
    %288 = vperm.xlu0 %287, %v280
    %v289 = vpop.permute.xlu0 %288
    %v291 = vmul.f32 %v51, %v284
    %v292 = vmul.f32 %v52, %v289
    %293 = vmatpush.msra.mxu0 0.0
    %294 = vmatpush.msra.mxu0 0.0
    %295 = vmatpush.msra.mxu0 0.0
    %296 = vmatpush.msra.mxu0 0.0
    %297 = vmatpush.msra.mxu0 0.0
    %298 = vmatpush.msra.mxu0 0.0
    %299 = vmatpush.msra.mxu0 0.0
    %300 = vmatpush.msra.mxu0 0.0
    %301 = vmatpush.msra.mxu0 0.0
    %302 = vmatpush.msra.mxu0 0.0
    %303 = vmatpush.msra.mxu0 0.0
    %304 = vmatpush.msra.mxu0 0.0
    %305 = vmatpush.msra.mxu0 0.0
    %306 = vmatpush.msra.mxu0 0.0
    %307 = vmatpush.msra.mxu0 %v278
    %308 = vmatpush.msra.mxu0 %v277
    %309 = vmatmul.f32.gmra.mxu0 %v107
    %v310 = vpop.f32.mrf.mxu0
    %v311 = vadd.f32 1.0, %v310
    %312 = vmatmul.f32.gmra.mxu0 %v110
    %v313 = vpop.f32.mrf.mxu0
    %v314 = vadd.f32 1.0, %v313
    %315 = vdwg.mxu0
    %v316 = vmul.f32 %v277, %v311
    %v317 = vmul.f32 %v278, %v314
    %vm318 = vcmp.gt.f32.partialorder %v316, 0.0
    %vm319 = vcmp.gt.f32.partialorder %v317, 0.0
    %v320 = vrsqrt.pop %v316
    %v321 = vmul.f32 %v320, %v316
    %v322 = vmul.f32 %v321, %v320
    %v323 = vmul.f32 0.5, %v322
    %v324 = vsub.f32 1.5, %v323
    %v325 = vmul.f32 %v320, %v324
    %vm326 = vweird.f32 %v316
    %vm327 = vweird.f32 %v320
    %vm328 = vmor %vm326, %vm327
    %v329 = vsel %vm328, %v320, %v325
    %v330 = vrsqrt.pop %v317
    %v331 = vmul.f32 %v330, %v317
    %v332 = vmul.f32 %v331, %v330
    %v333 = vmul.f32 0.5, %v332
    %v334 = vsub.f32 1.5, %v333
    %v335 = vmul.f32 %v330, %v334
    %vm336 = vweird.f32 %v317
    %vm337 = vweird.f32 %v330
    %vm338 = vmor %vm336, %vm337
    %v339 = vsel %vm338, %v330, %v335
    %v340 = vsel %vm318, %v329, 0.0
    %v341 = vsel %vm319, %v339, 0.0
    %v342 = vld [vmem:[%s4] sm:$0x3]
    %344 = vset.pattern.permute.xlu0 0
    %345 = vperm.xlu0 %344, %v291
    %v346 = vpop.permute.xlu0 %345
    %349 = vset.pattern.permute.xlu0 0
    %350 = vperm.xlu0 %349, %v292
    %v351 = vpop.permute.xlu0 %350
    %v353 = vperm.slane %v342, 0
    %v354 = vmul.f32 %v346, %v353
    %v355 = vmul.f32 %v351, %v353
    %356 = vset.pattern.permute.xlu0 1
    %357 = vperm.xlu0 %356, %v291
    %v358 = vpop.permute.xlu0 %357
    %360 = vset.pattern.permute.xlu0 1
    %361 = vperm.xlu0 %360, %v292
    %v362 = vpop.permute.xlu0 %361
    %v364 = vperm.slane %v342, 1
    %v365 = vmul.f32 %v358, %v364
    %v366 = vmul.f32 %v362, %v364
    %v367 = vadd.f32 %v354, %v365
    %v368 = vadd.f32 %v355, %v366
    %370 = vset.pattern.permute.xlu0 0
    %371 = vperm.xlu0 %370, %v340
    %v372 = vpop.permute.xlu0 %371
    %375 = vset.pattern.permute.xlu0 0
    %376 = vperm.xlu0 %375, %v341
    %v377 = vpop.permute.xlu0 %376
    %v379 = vmul.f32 %v372, %v367
    %v380 = vmul.f32 %v377, %v368
    %381 = vmatpush.msra.mxu0 0.0
    %382 = vmatpush.msra.mxu0 0.0
    %383 = vmatpush.msra.mxu0 0.0
    %384 = vmatpush.msra.mxu0 0.0
    %385 = vmatpush.msra.mxu0 0.0
    %386 = vmatpush.msra.mxu0 0.0
    %387 = vmatpush.msra.mxu0 0.0
    %388 = vmatpush.msra.mxu0 0.0
    %389 = vmatpush.msra.mxu0 0.0
    %390 = vmatpush.msra.mxu0 0.0
    %391 = vmatpush.msra.mxu0 0.0
    %392 = vmatpush.msra.mxu0 0.0
    %393 = vmatpush.msra.mxu0 0.0
    %394 = vmatpush.msra.mxu0 0.0
    %395 = vmatpush.msra.mxu0 %v380
    %396 = vmatpush.msra.mxu0 %v379
    %397 = vmatmul.f32.gmra.mxu0 %v107
    %v398 = vpop.f32.mrf.mxu0
    %v399 = vadd.f32 %v379, %v398
    %400 = vmatmul.f32.gmra.mxu0 %v110
    %v401 = vpop.f32.mrf.mxu0
    %v402 = vadd.f32 %v380, %v401
    %403 = vdwg.mxu0
    %v404 = vmul.f32 %v372, %v399
    %v405 = vmul.f32 %v377, %v402
    %v406 = vld [vmem:[%s7] sm:$0x1]
    %v407 = vperm.slane %v406, 0
    %v408 = vadd.f32 %v404, %v407
    %v409 = vadd.f32 %v405, %v407
    %v410 = vmax.f32 %v408, 0.0
    %v411 = vmax.f32 %v409, 0.0
    %v412 = vld [vmem:[%s7 + $0x3] sm:$0x1]
    %v413 = vperm.slane %v412, 0
    %v414 = vadd.f32 %v410, %v413
    %v415 = vadd.f32 %v411, %v413
    %v416 = vpack.c.bf16 %v415, %v414
    %v417 = vld [vmem:[%s5] sm:$0xf]
    %v418 = vld [vmem:[%s5 + $0x4] sm:$0xf]
    %v419 = vld [vmem:[%s5 + $0x8] sm:$0xf]
    %v420 = vld [vmem:[%s5 + $0xc] sm:$0xf]
    %v421 = vld [vmem:[%s5 + $0x10] sm:$0xf]
    %v422 = vld [vmem:[%s5 + $0x14] sm:$0xf]
    %v423 = vld [vmem:[%s5 + $0x18] sm:$0xf]
    %v424 = vld [vmem:[%s5 + $0x1c] sm:$0xf]
    %v425 = vld [vmem:[%s5 + $0x20] sm:$0xf]
    %v426 = vld [vmem:[%s5 + $0x24] sm:$0xf]
    %v427 = vld [vmem:[%s5 + $0x28] sm:$0xf]
    %v428 = vld [vmem:[%s5 + $0x2c] sm:$0xf]
    %v429 = vld [vmem:[%s5 + $0x30] sm:$0xf]
    %v430 = vld [vmem:[%s5 + $0x34] sm:$0xf]
    %v431 = vld [vmem:[%s5 + $0x38] sm:$0xf]
    %v432 = vld [vmem:[%s5 + $0x3c] sm:$0xf]
    %v449 = vunpack.c.l.b16 %v417
    %v450 = vunpack.c.l.b16 %v418
    %v451 = vunpack.c.l.b16 %v419
    %v452 = vunpack.c.l.b16 %v420
    %v453 = vunpack.c.l.b16 %v421
    %v454 = vunpack.c.l.b16 %v422
    %v455 = vunpack.c.l.b16 %v423
    %v456 = vunpack.c.l.b16 %v424
    %v457 = vunpack.c.l.b16 %v425
    %v458 = vunpack.c.l.b16 %v426
    %v459 = vunpack.c.l.b16 %v427
    %v460 = vunpack.c.l.b16 %v428
    %v461 = vunpack.c.l.b16 %v429
    %v462 = vunpack.c.l.b16 %v430
    %v463 = vunpack.c.l.b16 %v431
    %v464 = vunpack.c.l.b16 %v432
    %v465 = vpack.c.b16 %v450, %v449
    %v466 = vpack.c.b16 %v452, %v451
    %v467 = vpack.c.b16 %v454, %v453
    %v468 = vpack.c.b16 %v456, %v455
    %v469 = vpack.c.b16 %v458, %v457
    %v470 = vpack.c.b16 %v460, %v459
    %v471 = vpack.c.b16 %v462, %v461
    %v472 = vpack.c.b16 %v464, %v463
    %481 = vmatpush.bf16.msra.mxu0 %v472
    %482 = vmatpush.bf16.msra.mxu0 %v471
    %483 = vmatpush.bf16.msra.mxu0 %v470
    %484 = vmatpush.bf16.msra.mxu0 %v469
    %485 = vmatpush.bf16.msra.mxu0 %v468
    %486 = vmatpush.bf16.msra.mxu0 %v467
    %487 = vmatpush.bf16.msra.mxu0 %v466
    %488 = vmatpush.bf16.msra.mxu0 %v465
    %489 = vmatmul.bf16.gmra.mxu0 %v416
    %v490 = vpop.f32.mrf.mxu0
    %v491 = vadd.f32 0.0, %v490
    %v492 = vpop.f32.mrf.mxu0
    %v493 = vadd.f32 0.0, %v492
    %494 = vdwg.mxu0
    %v495 = vmul.f32 %v372, %v491
    %v496 = vmul.f32 %v377, %v493
    %497 = vmatpush.msra.mxu0 0.0
    %498 = vmatpush.msra.mxu0 0.0
    %499 = vmatpush.msra.mxu0 0.0
    %500 = vmatpush.msra.mxu0 0.0
    %501 = vmatpush.msra.mxu0 0.0
    %502 = vmatpush.msra.mxu0 0.0
    %503 = vmatpush.msra.mxu0 0.0
    %504 = vmatpush.msra.mxu0 0.0
    %505 = vmatpush.msra.mxu0 0.0
    %506 = vmatpush.msra.mxu0 0.0
    %507 = vmatpush.msra.mxu0 0.0
    %508 = vmatpush.msra.mxu0 0.0
    %509 = vmatpush.msra.mxu0 0.0
    %510 = vmatpush.msra.mxu0 0.0
    %511 = vmatpush.msra.mxu0 %v496
    %512 = vmatpush.msra.mxu0 %v495
    %513 = vmatmul.f32.gmra.mxu0 %v107
    %v514 = vpop.f32.mrf.mxu0
    %v515 = vadd.f32 %v495, %v514
    %516 = vmatmul.f32.gmra.mxu0 %v110
    %v517 = vpop.f32.mrf.mxu0
    %v518 = vadd.f32 %v496, %v517
    %519 = vdwg.mxu0
    %v520 = vmul.f32 %v372, %v515
    %v521 = vmul.f32 %v377, %v518
    %v522 = vld [vmem:[%s7 + $0x1] sm:$0x1]
    %v523 = vperm.slane %v522, 0
    %v524 = vadd.f32 %v520, %v523
    %v525 = vadd.f32 %v521, %v523
    %v526 = vmax.f32 %v524, 0.0
    %v527 = vmax.f32 %v525, 0.0
    %v528 = vld [vmem:[%s7 + $0x4] sm:$0x1]
    %v529 = vperm.slane %v528, 0
    %v530 = vadd.f32 %v526, %v529
    %v531 = vadd.f32 %v527, %v529
    %v532 = vpack.c.bf16 %v531, %v530
    %v533 = vld [vmem:[%s6] sm:$0xf]
    %v534 = vld [vmem:[%s6 + $0x4] sm:$0xf]
    %v535 = vld [vmem:[%s6 + $0x8] sm:$0xf]
    %v536 = vld [vmem:[%s6 + $0xc] sm:$0xf]
    %v537 = vld [vmem:[%s6 + $0x10] sm:$0xf]
    %v538 = vld [vmem:[%s6 + $0x14] sm:$0xf]
    %v539 = vld [vmem:[%s6 + $0x18] sm:$0xf]
    %v540 = vld [vmem:[%s6 + $0x1c] sm:$0xf]
    %v541 = vld [vmem:[%s6 + $0x20] sm:$0xf]
    %v542 = vld [vmem:[%s6 + $0x24] sm:$0xf]
    %v543 = vld [vmem:[%s6 + $0x28] sm:$0xf]
    %v544 = vld [vmem:[%s6 + $0x2c] sm:$0xf]
    %v545 = vld [vmem:[%s6 + $0x30] sm:$0xf]
    %v546 = vld [vmem:[%s6 + $0x34] sm:$0xf]
    %v547 = vld [vmem:[%s6 + $0x38] sm:$0xf]
    %v548 = vld [vmem:[%s6 + $0x3c] sm:$0xf]
    %v565 = vunpack.c.l.b16 %v533
    %v566 = vunpack.c.l.b16 %v534
    %v567 = vunpack.c.l.b16 %v535
    %v568 = vunpack.c.l.b16 %v536
    %v569 = vunpack.c.l.b16 %v537
    %v570 = vunpack.c.l.b16 %v538
    %v571 = vunpack.c.l.b16 %v539
    %v572 = vunpack.c.l.b16 %v540
    %v573 = vunpack.c.l.b16 %v541
    %v574 = vunpack.c.l.b16 %v542
    %v575 = vunpack.c.l.b16 %v543
    %v576 = vunpack.c.l.b16 %v544
    %v577 = vunpack.c.l.b16 %v545
    %v578 = vunpack.c.l.b16 %v546
    %v579 = vunpack.c.l.b16 %v547
    %v580 = vunpack.c.l.b16 %v548
    %v581 = vpack.c.b16 %v566, %v565
    %v582 = vpack.c.b16 %v568, %v567
    %v583 = vpack.c.b16 %v570, %v569
    %v584 = vpack.c.b16 %v572, %v571
    %v585 = vpack.c.b16 %v574, %v573
    %v586 = vpack.c.b16 %v576, %v575
    %v587 = vpack.c.b16 %v578, %v577
    %v588 = vpack.c.b16 %v580, %v579
    %597 = vmatpush.bf16.msra.mxu0 %v588
    %598 = vmatpush.bf16.msra.mxu0 %v587
    %599 = vmatpush.bf16.msra.mxu0 %v586
    %600 = vmatpush.bf16.msra.mxu0 %v585
    %601 = vmatpush.bf16.msra.mxu0 %v584
    %602 = vmatpush.bf16.msra.mxu0 %v583
    %603 = vmatpush.bf16.msra.mxu0 %v582
    %604 = vmatpush.bf16.msra.mxu0 %v581
    %605 = vmatmul.bf16.gmra.mxu0 %v532
    %v606 = vpop.f32.mrf.mxu0
    %v607 = vadd.f32 0.0, %v606
    %v608 = vpop.f32.mrf.mxu0
    %v609 = vadd.f32 0.0, %v608
    %610 = vdwg.mxu0
    %v611 = vmul.f32 %v372, %v607
    %v612 = vmul.f32 %v377, %v609
    %613 = vmatpush.msra.mxu0 0.0
    %614 = vmatpush.msra.mxu0 0.0
    %615 = vmatpush.msra.mxu0 0.0
    %616 = vmatpush.msra.mxu0 0.0
    %617 = vmatpush.msra.mxu0 0.0
    %618 = vmatpush.msra.mxu0 0.0
    %619 = vmatpush.msra.mxu0 0.0
    %620 = vmatpush.msra.mxu0 0.0
    %621 = vmatpush.msra.mxu0 0.0
    %622 = vmatpush.msra.mxu0 0.0
    %623 = vmatpush.msra.mxu0 0.0
    %624 = vmatpush.msra.mxu0 0.0
    %625 = vmatpush.msra.mxu0 0.0
    %626 = vmatpush.msra.mxu0 0.0
    %627 = vmatpush.msra.mxu0 %v612
    %628 = vmatpush.msra.mxu0 %v611
    %629 = vmatmul.f32.gmra.mxu0 %v107
    %v630 = vpop.f32.mrf.mxu0
    %v631 = vadd.f32 %v611, %v630
    %632 = vmatmul.f32.gmra.mxu0 %v110
    %v633 = vpop.f32.mrf.mxu0
    %v634 = vadd.f32 %v612, %v633
    %635 = vdwg.mxu0
    %v636 = vmul.f32 %v372, %v631
    %v637 = vmul.f32 %v377, %v634
    %v638 = vld [vmem:[%s7 + $0x2] sm:$0x1]
    %v639 = vperm.slane %v638, 0
    %v640 = vadd.f32 %v636, %v639
    %v641 = vadd.f32 %v637, %v639
    %v642 = vmax.f32 %v640, 0.0
    %v643 = vmax.f32 %v641, 0.0
    %v644 = vld [vmem:[%s7 + $0x5] sm:$0x1]
    %v645 = vperm.slane %v644, 0
    %v646 = vadd.f32 %v642, %v645
    %v647 = vadd.f32 %v643, %v645
    %vm648 = vcmp.gt.f32.partialorder %v277, 0.5
    %vm649 = vcmp.gt.f32.partialorder %v278, 0.5
    %v650 = vsel %vm648, 1, 0
    %v651 = vsel %vm649, 1, 0
    %652 = vset.pattern.permute.xlu0 0
    %653 = vperm.xlu0 %652, %v650
    %v654 = vpop.permute.xlu0 %653
    %655 = vset.pattern.permute.xlu0 0
    %656 = vperm.xlu0 %655, %v651
    %v657 = vpop.permute.xlu0 %656
    %vm658 = vcmp.eq.s32.totalorder %v654, 1
    %vm659 = vcmp.eq.s32.totalorder %v657, 1
    %v660 = vsel %vm658, %v646, -1e+30
    %v661 = vsel %vm659, %v647, -1e+30
    %v662 = vrot.slane %v660, 4
    %v663 = vmax.f32 %v660, %v662
    %v664 = vrot.slane %v663, 2
    %v665 = vmax.f32 %v663, %v664
    %v666 = vrot.slane %v665, 1
    %v667 = vmax.f32 %v665, %v666
    %v668 = vrot.slane %v661, 4
    %v669 = vmax.f32 %v661, %v668
    %v670 = vrot.slane %v669, 2
    %v671 = vmax.f32 %v669, %v670
    %v672 = vrot.slane %v671, 1
    %v673 = vmax.f32 %v671, %v672
    %vm674 = vcmask 7168
    %v675 = vsel %vm674, %v277, -inf
    %v676 = vrot.slane %v675, 4
    %v677 = vmax.f32 %v675, %v676
    %v678 = vrot.slane %v677, 2
    %v679 = vmax.f32 %v677, %v678
    %v680 = vrot.slane %v679, 1
    %v681 = vmax.f32 %v679, %v680
    %v682 = vsel %vm674, %v278, -inf
    %v683 = vrot.slane %v682, 4
    %v684 = vmax.f32 %v682, %v683
    %v685 = vrot.slane %v684, 2
    %v686 = vmax.f32 %v684, %v685
    %v687 = vrot.slane %v686, 1
    %v688 = vmax.f32 %v686, %v687
    %vm689 = vcmp.gt.f32.partialorder %v681, 0.5
    %vm690 = vcmp.gt.f32.partialorder %v688, 0.5
    %v691 = vsel %vm689, 1, 0
    %v692 = vsel %vm690, 1, 0
    %693 = vset.pattern.permute.xlu0 0
    %694 = vperm.xlu0 %693, %v691
    %v695 = vpop.permute.xlu0 %694
    %696 = vset.pattern.permute.xlu0 0
    %697 = vperm.xlu0 %696, %v692
    %v698 = vpop.permute.xlu0 %697
    %vm699 = vcmp.eq.s32.totalorder %v695, 1
    %vm700 = vcmp.eq.s32.totalorder %v698, 1
    %v701 = vsel %vm699, %v667, 0.0
    %v702 = vsel %vm700, %v673, 0.0
    %v703 = vld [vmem:[%s8] sm:$0xff]
    %v704 = vld [vmem:[%s8 + $0x8] sm:$0xff]
    %v705 = vld [vmem:[%s8 + $0x10] sm:$0xff]
    %v706 = vld [vmem:[%s8 + $0x18] sm:$0xff]
    %v707 = vld [vmem:[%s8 + $0x20] sm:$0xff]
    %v708 = vld [vmem:[%s8 + $0x28] sm:$0xff]
    %v709 = vld [vmem:[%s8 + $0x30] sm:$0xff]
    %v710 = vld [vmem:[%s8 + $0x38] sm:$0xff]
    %v711 = vld [vmem:[%s8 + $0x40] sm:$0xff]
    %v712 = vld [vmem:[%s8 + $0x48] sm:$0xff]
    %v713 = vld [vmem:[%s8 + $0x50] sm:$0xff]
    %v714 = vld [vmem:[%s8 + $0x58] sm:$0xff]
    %v715 = vld [vmem:[%s8 + $0x60] sm:$0xff]
    %v716 = vld [vmem:[%s8 + $0x68] sm:$0xff]
    %v717 = vld [vmem:[%s8 + $0x70] sm:$0xff]
    %v718 = vld [vmem:[%s8 + $0x78] sm:$0xff]
    %v719 = vld [vmem:[%s9] sm:$0x1]
    %v721 = vperm.slane %v719, 0
    %vm725 = vcmask 1041409
    %v726 = vsel %vm725, %v702, %v701
    %728 = vmatpush.msra.mxu0 %v718
    %729 = vmatpush.msra.mxu0 %v717
    %730 = vmatpush.msra.mxu0 %v716
    %731 = vmatpush.msra.mxu0 %v715
    %732 = vmatpush.msra.mxu0 %v714
    %733 = vmatpush.msra.mxu0 %v713
    %734 = vmatpush.msra.mxu0 %v712
    %735 = vmatpush.msra.mxu0 %v711
    %736 = vmatpush.msra.mxu0 %v710
    %737 = vmatpush.msra.mxu0 %v709
    %738 = vmatpush.msra.mxu0 %v708
    %739 = vmatpush.msra.mxu0 %v707
    %740 = vmatpush.msra.mxu0 %v706
    %741 = vmatpush.msra.mxu0 %v705
    %742 = vmatpush.msra.mxu0 %v704
    %743 = vmatpush.msra.mxu0 %v703
    %744 = vmatmul.f32.gmra.mxu0 %v726
    %v745 = vpop.f32.mrf.mxu0
    %v746 = vadd.f32 %v721, %v745
    %747 = vdwg.mxu0
    %vm748 = vcmask 17408
    %v749 = vsel %vm748, %v746, -inf
    %750 = vmax.xlane.f32.xlu0 %v749
    %v751 = vpop.xlane.xlu0 %750
    %v752 = vsub.f32 %v746, %v751
    %v753 = vmul.f32 %v752, 1.442695
    %v754 = vpow.pop %v753
    %v755 = vsel %vm748, %v754, 0.0
    %756 = vadd.xlane.f32.xlu0 %v755
    %v757 = vpop.xlane.xlu0 %756
    %v758 = vlog2.pop %v757
    %v759 = vmul.f32 %v758, 0.6931472
    %v760 = vsub.f32 %v752, %v759
    %761 = vst.msk [vmem:[#allocation5] sm:$0x3] %vm748, %v760
    // Predicated region
    $region46: #{net_forward.1} parent=1 // pred_check
      _
    $region47: #{net_forward.1} parent=1 // pred_check_branch
      %763 = sbr.rel (0) target = $region49
    $region48: #{net_forward.1} parent=1 // pred_region
      %765 = vsyncadd [#allocation3], 0
      %s767 = sshll.u32 [#allocation5], 4
      %s768 = int_to_ptr.vmem [resolvable:$true] %s767
      %s769 = sshll.u32 %s10, 4
      %s770 = int_to_ptr.hbm [resolvable:$true] %s769
      %772 = dma.vmem_to_hbm [thread:$0]  %s768, 32, %s770, [#allocation3]
    $region49: #{net_forward.1} parent=1 // pred_fallthru
      _
    // Predicated region
    $region50: #{net_forward.1} parent=1 // pred_check
      _
    $region51: #{net_forward.1} parent=1 // pred_check_branch
      %774 = sbr.rel (0) target = $region53
    $region52: #{net_forward.1} parent=1 // pred_region
      %776 = dma.done [#allocation3], 32
    $region53: #{net_forward.1} parent=1 // pred_fallthru
      _
    %777 = vsyncpa [#allocation3], 1
    %778 = vsyncpa [#allocation4], 1

</llo_original>
